<compile_context>
chip_gen: v7x
topology: tpu7x:2x2x1
jax: 0.10.0
libtpu: 0.0.40
codegen_flags: <defaults>
</compile_context>

<pallas_src>
import functools

import jax
import jax.numpy as jnp
from jax.experimental import pallas as pl
from jax.experimental.pallas import tpu as pltpu


def _shuffle_dtype(dtype):
    """32-bit container dtype used while moving data (exact for <=32-bit types)."""
    dtype = jnp.dtype(dtype)
    if dtype.itemsize >= 4:
        return dtype
    if jnp.issubdtype(dtype, jnp.floating):
        return jnp.dtype(jnp.float32)
    return jnp.dtype(jnp.int32)


def _pixel_unshuffle_kernel(x_ref, o_ref, t_ref, *, k, w, rh, cblk, shuf_dtype):
    """Unshuffle `cblk` stacked row-tiles of k*rh input rows each.

    x_ref: (cblk * rh * k, k * w)  -- cblk planes / row-tiles stacked on sublanes
    o_ref: (cblk, k*k, rh, w)
    t_ref: (k*w, cblk*rh)          -- VMEM bounce buffer (32-bit container)
    """
    R = cblk * rh
    for y in range(k):
        # Row (y) phase: sublane-strided read of input rows i*k + y.
        rows = x_ref[pl.ds(y, R, stride=k), :]                    # (R, k*w)
        # Column (x) phase: transpose so the stride-k lane gather becomes a
        # sublane-strided read of the scratch (XLU work, no FLOPs, no NaN).
        t_ref[...] = rows.astype(shuf_dtype).T                    # (k*w, R)
        for xo in range(k):
            # Only one `cols` value is live per body (bounded vreg pressure).
            cols_t = t_ref[pl.ds(xo, w, stride=k), :]              # (w, R)
            cols = cols_t.T                                        # (R, w)
            o_ref[:, y * k + xo, :, :] = (
                cols.reshape(cblk, rh, w).astype(o_ref.dtype))


def _pick_tiling(P, H, W, k, dtype, budget_bytes=24 << 20):
    """Choose (cblk, rt): cblk whole planes (rt == H) or a row tile of one plane.

    Footprint counts 2x double-buffered input + 2x output blocks + the
    transpose scratch and live temporaries.  Never exceeds the budget via a
    silent fallback; prefers >= 2 total grid steps and dtype-aware sublane
    alignment (8 f32 / 16 bf16 / 32 int8).
    """
    itemsize = jnp.dtype(dtype).itemsize
    shuf_itemsize = max(4, itemsize)
    pref_align = 8 * max(1, 4 // itemsize)
    h = H // k

    def footprint(cblk, rt):
        blk = cblk * rt * W * itemsize                 # input block (== output bytes)
        scratch = W * cblk * (rt // k) * shuf_itemsize
        temps = 2 * scratch                            # rows/cols live values + slack
        return 2 * blk + 2 * blk + scratch + temps

    def legal(cblk, rt):
        if rt % k:
            return False
        rows_in, rh = cblk * rt, rt // k
        in_ok = (rows_in % 8 == 0) or (rows_in == P * H)     # (8,128) rule or full dim
        out_ok = (rh % 8 == 0) or (rh == h)
        return in_ok and out_ok

    cands = [(d, H) for d in range(1, P + 1) if P % d == 0 and legal(d, H)]
    cands += [(1, r) for r in range(k, H, k) if H % r == 0 and legal(1, r)]

    def steps(c):
        return (P // c[0]) * (H // c[1])

    fitting = [c for c in cands if footprint(*c) <= budget_bytes]
    if not fitting:
        # Nothing fits the budget: take the smallest legal block (correctness
        # first; vmem_limit_bytes is raised by the caller to cover it).
        choice = min(cands, key=lambda c: footprint(*c))
        return choice, footprint(*choice)

    pool = fitting
    multi = [c for c in pool if steps(c) >= 2]         # keep both v7x cores busy
    if multi:
        pool = multi
    aligned = [c for c in pool if (c[0] * c[1]) % pref_align == 0]
    if aligned:
        pool = aligned
    choice = max(pool, key=lambda c: footprint(*c))    # biggest block that fits
    return choice, footprint(*choice)


def pixel_unshuffle(x, downscale_factor):
    """Pallas-backed equivalent of archs.modules.pixel_unshuffle (NCHW)."""
    B, C, H, W = x.shape
    k = int(downscale_factor)
    assert H % k == 0 and W % k == 0, "spatial dims must be divisible by k"
    if k == 1:
        return x
    h, w = H // k, W // k
    P = B * C  # flat plane axis
    itemsize = jnp.dtype(x.dtype).itemsize
    shuf_dtype = _shuffle_dtype(x.dtype)

    (cblk, rt), fp_bytes = _pick_tiling(P, H, W, k, x.dtype)
    rh = rt // k
    n_pt = P // cblk          # plane-group grid axis
    n_rt = H // rt            # row-tile grid axis (1 unless a plane is huge)
    grid = (n_pt, n_rt)

    kernel = functools.partial(_pixel_unshuffle_kernel, k=k, w=w, rh=rh,
                               cblk=cblk, shuf_dtype=shuf_dtype)

    vmem_limit = min(128 << 20, max(32 << 20, fp_bytes + (8 << 20)))

    out = pl.pallas_call(
        kernel,
        out_shape=jax.ShapeDtypeStruct((P, k * k, h, w), x.dtype),
        grid_spec=pltpu.PrefetchScalarGridSpec(
            num_scalar_prefetch=0,
            grid=grid,
            in_specs=[
                # cblk planes (or one row tile) stacked on sublanes, full width.
                pl.BlockSpec((cblk * rt, W),
                             lambda pi, ti: (pi * n_rt + ti, 0)),
            ],
            out_specs=pl.BlockSpec((cblk, k * k, rh, w),
                                   lambda pi, ti: (pi, 0, ti, 0)),
            scratch_shapes=[pltpu.VMEM((W, cblk * rh), shuf_dtype)],
        ),
        compiler_params=pltpu.CompilerParams(
            dimension_semantics=("parallel", "parallel"),
            vmem_limit_bytes=vmem_limit),
        cost_estimate=pl.CostEstimate(
            flops=0, transcendentals=0,
            bytes_accessed=2 * P * H * W * itemsize),
    )(x.reshape(P * H, W))
    return out.reshape(B, C * k * k, h, w)


class PixelUnshuffle:
    """Thin module-like wrapper mirroring the PyTorch class."""

    def __init__(self, downscale_factor):
        self.downscale_factor = downscale_factor

    def __call__(self, x):
        return pixel_unshuffle(x, self.downscale_factor)


def _reference_pixel_unshuffle(x, k):
    # Pure-JAX reference reproducing the PyTorch grouped-conv semantics.
    B, C, H, W = x.shape
    h, w = H // k, W // k
    xr = x.reshape(B, C, h, k, w, k)
    xt = jnp.transpose(xr, (0, 1, 3, 5, 2, 4))  # (B, C, y, x, h, w)
    return xt.reshape(B, C * k * k, h, w)


if __name__ == "__main__":
    key = jax.random.PRNGKey(0)
    B, C, H, W = 2, 4, 16, 16
    k = 2
    x = jax.random.normal(key, (B, C, H, W), dtype=jnp.float32)

    mod = PixelUnshuffle(downscale_factor=k)
    out = jax.block_until_ready(mod(x))

    ref = _reference_pixel_unshuffle(x, k)
    assert out.shape == (B, C * k * k, H // k, W // k), out.shape
    assert jnp.allclose(out, ref, atol=0.0, rtol=0.0), "mismatch vs reference"

    print("KERNEL_OK")
</pallas_src>

<mosaic_0001>
module attributes {stable_mosaic.version = 11 : i64} {
  func.func @_pixel_unshuffle_kernel(%arg0: i32, %arg1: i32, %arg2: memref<64x16xf32, #tpu.memory_space<vmem>>, %arg3: memref<4x4x8x8xf32, #tpu.memory_space<vmem>>, %arg4: memref<16x32xf32, #tpu.memory_space<vmem>>) attributes {dimension_semantics = [#tpu.dimension_semantics<parallel>, #tpu.dimension_semantics<parallel>], iteration_bounds = array<i64: 2, 1>, scalar_prefetch = 0 : i64, scratch_operands = 1 : i64, tpu.core_type = #tpu.core_type<tc>, window_params = [{transform_indices = @transform_0, window_bounds = array<i64: 64, 16>}, {transform_indices = @transform_1, window_bounds = array<i64: 4, 4, 8, 8>}]} {
    %c0 = arith.constant 0 : index
    %c0_0 = arith.constant 0 : index
    %0 = tpu.strided_load %arg2[%c0, %c0_0] {strides = array<i32: 2, 1>} : memref<64x16xf32, #tpu.memory_space<vmem>>, vector<32x16xf32>
    %1 = tpu.transpose %0, [1, 0] : vector<32x16xf32> -> vector<16x32xf32>
    %c0_1 = arith.constant 0 : index
    %c0_2 = arith.constant 0 : index
    %2 = vector.load %arg4[%c0_1, %c0_2] : memref<16x32xf32, #tpu.memory_space<vmem>>, vector<16x32xf32>
    tpu.vector_store %arg4[%c0_1, %c0_2], %1 {strides = array<i32>} : memref<16x32xf32, #tpu.memory_space<vmem>>, vector<16x32xf32>,
    %c0_3 = arith.constant 0 : index
    %c0_4 = arith.constant 0 : index
    %3 = tpu.strided_load %arg4[%c0_3, %c0_4] {strides = array<i32: 2, 1>} : memref<16x32xf32, #tpu.memory_space<vmem>>, vector<8x32xf32>
    %4 = tpu.transpose %3, [1, 0] : vector<8x32xf32> -> vector<32x8xf32>
    %5 = vector.shape_cast %4 : vector<32x8xf32> to vector<4x8x8xf32>
    %c0_5 = arith.constant 0 : index
    %c0_6 = arith.constant 0 : index
    %c0_7 = arith.constant 0 : index
    %c0_8 = arith.constant 0 : index
    %6 = vector.load %arg3[%c0_5, %c0_6, %c0_7, %c0_8] : memref<4x4x8x8xf32, #tpu.memory_space<vmem>>, vector<4x1x8x8xf32>
    %7 = vector.shape_cast %6 : vector<4x1x8x8xf32> to vector<4x8x8xf32>
    %8 = vector.shape_cast %5 : vector<4x8x8xf32> to vector<4x1x8x8xf32>
    tpu.vector_store %arg3[%c0_5, %c0_6, %c0_7, %c0_8], %8 {strides = array<i32>} : memref<4x4x8x8xf32, #tpu.memory_space<vmem>>, vector<4x1x8x8xf32>,
    %c1 = arith.constant 1 : index
    %c0_9 = arith.constant 0 : index
    %9 = tpu.strided_load %arg4[%c1, %c0_9] {strides = array<i32: 2, 1>} : memref<16x32xf32, #tpu.memory_space<vmem>>, vector<8x32xf32>
    %10 = tpu.transpose %9, [1, 0] : vector<8x32xf32> -> vector<32x8xf32>
    %11 = vector.shape_cast %10 : vector<32x8xf32> to vector<4x8x8xf32>
    %c0_10 = arith.constant 0 : index
    %c1_11 = arith.constant 1 : index
    %c0_12 = arith.constant 0 : index
    %c0_13 = arith.constant 0 : index
    %12 = vector.load %arg3[%c0_10, %c1_11, %c0_12, %c0_13] : memref<4x4x8x8xf32, #tpu.memory_space<vmem>>, vector<4x1x8x8xf32>
    %13 = vector.shape_cast %12 : vector<4x1x8x8xf32> to vector<4x8x8xf32>
    %14 = vector.shape_cast %11 : vector<4x8x8xf32> to vector<4x1x8x8xf32>
    tpu.vector_store %arg3[%c0_10, %c1_11, %c0_12, %c0_13], %14 {strides = array<i32>} : memref<4x4x8x8xf32, #tpu.memory_space<vmem>>, vector<4x1x8x8xf32>,
    %c1_14 = arith.constant 1 : index
    %c0_15 = arith.constant 0 : index
    %15 = tpu.strided_load %arg2[%c1_14, %c0_15] {strides = array<i32: 2, 1>} : memref<64x16xf32, #tpu.memory_space<vmem>>, vector<32x16xf32>
    %16 = tpu.transpose %15, [1, 0] : vector<32x16xf32> -> vector<16x32xf32>
    %c0_16 = arith.constant 0 : index
    %c0_17 = arith.constant 0 : index
    %17 = vector.load %arg4[%c0_16, %c0_17] : memref<16x32xf32, #tpu.memory_space<vmem>>, vector<16x32xf32>
    tpu.vector_store %arg4[%c0_16, %c0_17], %16 {strides = array<i32>} : memref<16x32xf32, #tpu.memory_space<vmem>>, vector<16x32xf32>,
    %c0_18 = arith.constant 0 : index
    %c0_19 = arith.constant 0 : index
    %18 = tpu.strided_load %arg4[%c0_18, %c0_19] {strides = array<i32: 2, 1>} : memref<16x32xf32, #tpu.memory_space<vmem>>, vector<8x32xf32>
    %19 = tpu.transpose %18, [1, 0] : vector<8x32xf32> -> vector<32x8xf32>
    %20 = vector.shape_cast %19 : vector<32x8xf32> to vector<4x8x8xf32>
    %c0_20 = arith.constant 0 : index
    %c2 = arith.constant 2 : index
    %c0_21 = arith.constant 0 : index
    %c0_22 = arith.constant 0 : index
    %21 = vector.load %arg3[%c0_20, %c2, %c0_21, %c0_22] : memref<4x4x8x8xf32, #tpu.memory_space<vmem>>, vector<4x1x8x8xf32>
    %22 = vector.shape_cast %21 : vector<4x1x8x8xf32> to vector<4x8x8xf32>
    %23 = vector.shape_cast %20 : vector<4x8x8xf32> to vector<4x1x8x8xf32>
    tpu.vector_store %arg3[%c0_20, %c2, %c0_21, %c0_22], %23 {strides = array<i32>} : memref<4x4x8x8xf32, #tpu.memory_space<vmem>>, vector<4x1x8x8xf32>,
    %c1_23 = arith.constant 1 : index
    %c0_24 = arith.constant 0 : index
    %24 = tpu.strided_load %arg4[%c1_23, %c0_24] {strides = array<i32: 2, 1>} : memref<16x32xf32, #tpu.memory_space<vmem>>, vector<8x32xf32>
    %25 = tpu.transpose %24, [1, 0] : vector<8x32xf32> -> vector<32x8xf32>
    %26 = vector.shape_cast %25 : vector<32x8xf32> to vector<4x8x8xf32>
    %c0_25 = arith.constant 0 : index
    %c3 = arith.constant 3 : index
    %c0_26 = arith.constant 0 : index
    %c0_27 = arith.constant 0 : index
    %27 = vector.load %arg3[%c0_25, %c3, %c0_26, %c0_27] : memref<4x4x8x8xf32, #tpu.memory_space<vmem>>, vector<4x1x8x8xf32>
    %28 = vector.shape_cast %27 : vector<4x1x8x8xf32> to vector<4x8x8xf32>
    %29 = vector.shape_cast %26 : vector<4x8x8xf32> to vector<4x1x8x8xf32>
    tpu.vector_store %arg3[%c0_25, %c3, %c0_26, %c0_27], %29 {strides = array<i32>} : memref<4x4x8x8xf32, #tpu.memory_space<vmem>>, vector<4x1x8x8xf32>,
    return
  }
  func.func @transform_0(%arg0: i32, %arg1: i32) -> (i32, i32) {
    %c1_i32 = arith.constant 1 : i32
    %0 = arith.muli %arg0, %c1_i32 : i32
    %1 = arith.addi %0, %arg1 : i32
    %c0_i32 = arith.constant 0 : i32
    %c0_i32_0 = arith.constant 0 : i32
    return %1, %c0_i32 : i32, i32
  }
  func.func @transform_1(%arg0: i32, %arg1: i32) -> (i32, i32, i32, i32) {
    %c0_i32 = arith.constant 0 : i32
    %c0_i32_0 = arith.constant 0 : i32
    %c0_i32_1 = arith.constant 0 : i32
    return %arg0, %c0_i32, %arg1, %c0_i32_0 : i32, i32, i32, i32
  }
}

</mosaic_0001>

<llo_original>
// kernel: tpu_custom_call.1
$region0: #{tpu_custom_call.1}
  #allocation0 [shape = 'u32[]', space=smem, size = 0x4, offset = 0x4, fixed_abs, tag = 'smem constant byte address 0x4 - core index']
  #allocation1 [shape = 'u32[144,128]{1,0:T(1,128)}', space=vmem, size = 0x12000, scoped, tag = 'internal scratch']
  #allocation2 [shape = 'f32[16,32]{1,0:T(8,128)}', space=vmem, size = 0x2000, scoped, tag = 'scratch operand']
  %s0 = inlined_call_operand.vmem [shape: f32[128,16], index: 0, kind: input, shape index: {}]
  %s1 = inlined_call_operand.hbm [shape: f32[8,4,8,8], index: 1, kind: output, shape index: {}]
  %s2 = sld [smem:[#allocation0]]
  $region37: #{tpu_custom_call.1} parent=0
    _
  %s4 = ssub.s32 1, %s2
  %s5 = scalar_select 0, %s4, %s2
  $region1: #{tpu_custom_call.1} parent=0
    #allocation3 [shape = 'u8[131072]{0}', space=vmem, size = 0x20000, scoped, tag = 'output window, operand 0']
    #allocation4 [shape = 's32[2]{0}', space=sflag, size = 0x8, scoped, tag = 'scoped memory for tpu_custom_call.1']
    %6 = vsyncpa [#allocation4], 0
    %s7 = scalar_lea.sflag [#allocation4], 1
    %8 = vsyncpa %s7, 0
    loop: start=0, step=1, limit=4
    $region2: #{tpu_custom_call.1} parent=1 // loop_pre_header
      _
    $region3: #{tpu_custom_call.1} parent=1 // loop_header
      %s10 = sphi 0, %s14
      %p11 = scmp.ge.s32.totalorder %s10, 4
      %s17 = sphi 0, %s29
      %s18 = sphi 0, %s25
      %s19 = sphi 0, %s17
      %s20 = sphi 0, %s18
      %s21 = sphi 0, %s19
      %s22 = sphi 0, %s20
      %s34 = sphi 0, %s36
      %s37 = sphi 0, %s34
      %s38 = sphi 0, %s37
      %s54 = sphi 0, %s38
      %s62 = sphi 0, %s64
      %s65 = sphi 0, %s62
      %s66 = sphi 0, %s65
      %s82 = sphi 0, %s66
    $region4: #{tpu_custom_call.1} parent=1 // loop_header_branch
      %13 = sbr.rel (%p11) target = $region8
    $region5: #{tpu_custom_call.1} parent=1 // loop_body
      %s15 = ssub.s32 %s10, 1
      %s16 = ssub.s32 %s10, 2
      %s23 = sadd.s32 1, %s18
      %p24 = scmp.ge.s32.totalorder %s23, 1
      %s25 = scalar_select %p24, 0, %s23
      %s26 = sadd.s32 1, %s17
      %s27 = scalar_select %p24, %s26, %s17
      %p28 = scmp.ge.s32.totalorder %s27, 2
      %s29 = scalar_select %p28, 0, %s27
      %s30 = sadd.s32 %s17, %s18
      %s31 = sadd.s32 %s29, %s25
      %s32 = ssub.s32 %s30, %s31
      %p33 = scmp.eq.s32.totalorder %s32, 0
      %s35 = sadd.s32 %s34, 1
      %s36 = scalar_select %p33, %s34, %s35
      %p39 = pneg %p33
      %p40 = scmp.eq.s32.totalorder %s10, 1
      %p41 = por %p39, %p40
      %p42 = scmp.ne.s32.totalorder %s34, %s37
      %p43 = scmp.eq.s32.totalorder %s10, 0
      %p44 = por %p42, %p43
      %p45 = scmp.ne.s32.totalorder %s34, %s37
      %p46 = scmp.eq.s32.totalorder %s15, 1
      %p47 = por %p45, %p46
      %p48 = scmp.ne.s32.totalorder %s37, %s38
      %p49 = scmp.eq.s32.totalorder %s15, 0
      %p50 = por %p48, %p49
      %p51 = scmp.ne.s32.totalorder %s37, %s38
      %p52 = scmp.eq.s32.totalorder %s16, 1
      %p53 = por %p51, %p52
      %p55 = scmp.ne.s32.totalorder %s38, %s54
      %p56 = scmp.eq.s32.totalorder %s16, 0
      %p57 = por %p55, %p56
      %s58 = ssub.s32 %s17, %s29
      %s59 = ssub.s32 %s18, %s25
      %s60 = sor.u32 %s58, %s59
      %p61 = scmp.eq.s32.totalorder %s60, 0
      %s63 = sadd.s32 %s62, 1
      %s64 = scalar_select %p61, %s62, %s63
      %p67 = pneg %p61
      %p68 = scmp.eq.s32.totalorder %s10, 1
      %p69 = por %p67, %p68
      %p70 = scmp.ne.s32.totalorder %s62, %s65
      %p71 = scmp.eq.s32.totalorder %s10, 0
      %p72 = por %p70, %p71
      %p73 = scmp.ne.s32.totalorder %s62, %s65
      %p74 = scmp.eq.s32.totalorder %s15, 1
      %p75 = por %p73, %p74
      %p76 = scmp.ne.s32.totalorder %s65, %s66
      %p77 = scmp.eq.s32.totalorder %s15, 0
      %p78 = por %p76, %p77
      %p79 = scmp.ne.s32.totalorder %s65, %s66
      %p80 = scmp.eq.s32.totalorder %s16, 1
      %p81 = por %p79, %p80
      %p83 = scmp.ne.s32.totalorder %s66, %s82
      %p84 = scmp.eq.s32.totalorder %s16, 0
      %p85 = por %p83, %p84
      %p86 = scmp.le.s32.totalorder 1, %s10
      %p87 = scmp.lt.s32.totalorder %s10, 3
      %p88 = pnand %p86, %p87
      %p89 = pneg %p88
      // Predicated region
      $region9: #{tpu_custom_call.1} parent=5 // pred_check
        _
      $region10: #{tpu_custom_call.1} parent=5 // pred_check_branch
        %91 = sbr.rel (%p88) target = $region12
      $region11: #{tpu_custom_call.1} parent=5 // pred_region
        %s92 = ssub.s32 %s10, 1
      $region12: #{tpu_custom_call.1} parent=5 // pred_fallthru
        _
      %p93 = scmp.lt.s32.totalorder %s10, 2
      // Predicated region
      $region13: #{tpu_custom_call.1} parent=5 // pred_check
        %p94 = pneg %p93
      $region14: #{tpu_custom_call.1} parent=5 // pred_check_branch
        %96 = sbr.rel (%p94) target = $region16
      $region15: #{tpu_custom_call.1} parent=5 // pred_region
        // Predicated region
        $region17: #{tpu_custom_call.1} parent=15 // pred_check
          %p97 = pneg %p44
        $region18: #{tpu_custom_call.1} parent=15 // pred_check_branch
          %99 = sbr.rel (%p97) target = $region20
        $region19: #{tpu_custom_call.1} parent=15 // pred_region
          %s100 = sadd.s32 %s17, %s18
          %s101 = smul.u32 8, %s100
          %p102 = scmp.lt.s32.totalorder %s101, 15
          %s103 = scalar_select %p102, %s101, 15
          %s104 = smul.addr %s103, 8
          %s105 = scalar_lea.vmem %s0, %s104
          %s106 = sadd.s32 %s17, %s18
          %s107 = smul.u32 8, %s106
        $region20: #{tpu_custom_call.1} parent=15 // pred_fallthru
          _
      $region16: #{tpu_custom_call.1} parent=5 // pred_fallthru
        _
      %p108 = scmp.le.s32.totalorder 1, %s10
      %p109 = scmp.lt.s32.totalorder %s10, 3
      %p110 = pnand %p108, %p109
      %p111 = pneg %p110
      // Predicated region
      $region21: #{tpu_custom_call.1} parent=5 // pred_check
        _
      $region22: #{tpu_custom_call.1} parent=5 // pred_check_branch
        %113 = sbr.rel (%p110) target = $region24
      $region23: #{tpu_custom_call.1} parent=5 // pred_region
        %s114 = ssub.s32 %s10, 1
        %s115 = sadd.s32 %s19, %s20
        %s116 = smul.u32 8, %s115
        %p117 = scmp.lt.s32.totalorder %s116, 15
        %s118 = scalar_select %p117, %s116, 15
        %s119 = smul.addr %s118, 8
        %s120 = scalar_lea.vmem %s0, %s119
        %p121 = pneg %p50
        %p122 = pneg %p47
        %p123 = pneg %p78
        %p124 = pneg %p75
        %s125 = sand.u32 %s65, 1
        %s126 = scalar_lea.sflag [#allocation4], %s125
        %s127 = sand.u32 %s65, 1
        %s128 = smul.addr %s127, 128
        %s129 = scalar_lea.vmem [#allocation3], %s128
        %s130 = sadd.s32 %s19, %s20
        %s131 = smul.u32 8, %s130
        %p132 = scmp.lt.s32.totalorder %s131, 15
        %s133 = scalar_select %p132, %s131, 15
        %s134 = smul.addr %s133, 8
        %s135 = scalar_lea.vmem %s0, %s134
        %s136 = sadd.s32 %s19, %s20
        %s137 = smul.u32 8, %s136
        %s138 = smul.u32 4, %s19
        %v139 = vld [vmem:[%s135] ss:$2 sm:$0xff]
        %s140 = scalar_lea.vmem %s135, 16
        %v141 = vld [vmem:[%s140] ss:$2 sm:$0xff]
        %s142 = scalar_lea.vmem %s135, 32
        %v143 = vld [vmem:[%s142] ss:$2 sm:$0xff]
        %s144 = scalar_lea.vmem %s135, 48
        %v145 = vld [vmem:[%s144] ss:$2 sm:$0xff]
        %146 = vxpose.xlu0.b32.start [1/16] %v139, 128
        %147 = vxpose.xlu0.b32.cont [2/16] %v141, 128
        %148 = vxpose.xlu0.b32.cont [3/16] %v143, 128
        %149 = vxpose.xlu0.b32.cont [4/16] %v145, 128
        %150 = vxpose.xlu0.b32.cont [5/16] 0.0, 128
        %151 = vxpose.xlu0.b32.cont [6/16] 0.0, 128
        %152 = vxpose.xlu0.b32.cont [7/16] 0.0, 128
        %153 = vxpose.xlu0.b32.cont [8/16] 0.0, 128
        %154 = vxpose.xlu0.b32.cont [9/16] 0.0, 128
        %155 = vxpose.xlu0.b32.cont [10/16] 0.0, 128
        %156 = vxpose.xlu0.b32.cont [11/16] 0.0, 128
        %157 = vxpose.xlu0.b32.cont [12/16] 0.0, 128
        %158 = vxpose.xlu0.b32.cont [13/16] 0.0, 128
        %159 = vxpose.xlu0.b32.cont [14/16] 0.0, 128
        %160 = vxpose.xlu0.b32.cont [15/16] 0.0, 128
        %161 = vxpose.xlu0.b32.end [16/16] 0.0, 128
        %v162 = vpop.trf.xlu0
        %v163 = vpop.trf.xlu0
        %v164 = vpop.trf.xlu0
        %v165 = vpop.trf.xlu0
        %v166 = vpop.trf.xlu0
        %v167 = vpop.trf.xlu0
        %v168 = vpop.trf.xlu0
        %v169 = vpop.trf.xlu0
        %v170 = vpop.trf.xlu0
        %v171 = vpop.trf.xlu0
        %v172 = vpop.trf.xlu0
        %v173 = vpop.trf.xlu0
        %v174 = vpop.trf.xlu0
        %v175 = vpop.trf.xlu0
        %v176 = vpop.trf.xlu0
        %v177 = vpop.trf.xlu0
        %vm178 = vcmask 261120
        %179 = vst.msk [vmem:[#allocation2] sm:$0xff] %vm178, %v162
        %180 = vst.msk [vmem:[#allocation2 + $0x8] sm:$0xff] %vm178, %v163
        %v181 = vld [vmem:[#allocation2] ss:$2 sm:$0xff]
        %182 = vxpose.xlu0.b32.start [1/16] %v181, 128
        %183 = vxpose.xlu0.b32.cont [2/16] 0.0, 128
        %184 = vxpose.xlu0.b32.cont [3/16] 0.0, 128
        %185 = vxpose.xlu0.b32.cont [4/16] 0.0, 128
        %186 = vxpose.xlu0.b32.cont [5/16] 0.0, 128
        %187 = vxpose.xlu0.b32.cont [6/16] 0.0, 128
        %188 = vxpose.xlu0.b32.cont [7/16] 0.0, 128
        %189 = vxpose.xlu0.b32.cont [8/16] 0.0, 128
        %190 = vxpose.xlu0.b32.cont [9/16] 0.0, 128
        %191 = vxpose.xlu0.b32.cont [10/16] 0.0, 128
        %192 = vxpose.xlu0.b32.cont [11/16] 0.0, 128
        %193 = vxpose.xlu0.b32.cont [12/16] 0.0, 128
        %194 = vxpose.xlu0.b32.cont [13/16] 0.0, 128
        %195 = vxpose.xlu0.b32.cont [14/16] 0.0, 128
        %196 = vxpose.xlu0.b32.cont [15/16] 0.0, 128
        %197 = vxpose.xlu0.b32.end [16/16] 0.0, 128
        %v198 = vpop.trf.xlu0
        %v199 = vpop.trf.xlu0
        %v200 = vpop.trf.xlu0
        %v201 = vpop.trf.xlu0
        %v202 = vpop.trf.xlu0
        %v203 = vpop.trf.xlu0
        %v204 = vpop.trf.xlu0
        %v205 = vpop.trf.xlu0
        %v206 = vpop.trf.xlu0
        %v207 = vpop.trf.xlu0
        %v208 = vpop.trf.xlu0
        %v209 = vpop.trf.xlu0
        %v210 = vpop.trf.xlu0
        %v211 = vpop.trf.xlu0
        %v212 = vpop.trf.xlu0
        %v213 = vpop.trf.xlu0
        %vm214 = vcmask 64512
        %215 = vst.msk [vmem:[%s129] sm:$0xff] %vm214, %v198
        %216 = vst.msk [vmem:[%s129 + $0x20] sm:$0xff] %vm214, %v199
        %217 = vst.msk [vmem:[%s129 + $0x40] sm:$0xff] %vm214, %v200
        %218 = vst.msk [vmem:[%s129 + $0x60] sm:$0xff] %vm214, %v201
        %s219 = scalar_lea.vmem [#allocation2], 1
        %v220 = vld [vmem:[%s219] ss:$2 sm:$0xff]
        %221 = vxpose.xlu0.b32.start [1/16] %v220, 128
        %222 = vxpose.xlu0.b32.cont [2/16] 0.0, 128
        %223 = vxpose.xlu0.b32.cont [3/16] 0.0, 128
        %224 = vxpose.xlu0.b32.cont [4/16] 0.0, 128
        %225 = vxpose.xlu0.b32.cont [5/16] 0.0, 128
        %226 = vxpose.xlu0.b32.cont [6/16] 0.0, 128
        %227 = vxpose.xlu0.b32.cont [7/16] 0.0, 128
        %228 = vxpose.xlu0.b32.cont [8/16] 0.0, 128
        %229 = vxpose.xlu0.b32.cont [9/16] 0.0, 128
        %230 = vxpose.xlu0.b32.cont [10/16] 0.0, 128
        %231 = vxpose.xlu0.b32.cont [11/16] 0.0, 128
        %232 = vxpose.xlu0.b32.cont [12/16] 0.0, 128
        %233 = vxpose.xlu0.b32.cont [13/16] 0.0, 128
        %234 = vxpose.xlu0.b32.cont [14/16] 0.0, 128
        %235 = vxpose.xlu0.b32.cont [15/16] 0.0, 128
        %236 = vxpose.xlu0.b32.end [16/16] 0.0, 128
        %v237 = vpop.trf.xlu0
        %v238 = vpop.trf.xlu0
        %v239 = vpop.trf.xlu0
        %v240 = vpop.trf.xlu0
        %v241 = vpop.trf.xlu0
        %v242 = vpop.trf.xlu0
        %v243 = vpop.trf.xlu0
        %v244 = vpop.trf.xlu0
        %v245 = vpop.trf.xlu0
        %v246 = vpop.trf.xlu0
        %v247 = vpop.trf.xlu0
        %v248 = vpop.trf.xlu0
        %v249 = vpop.trf.xlu0
        %v250 = vpop.trf.xlu0
        %v251 = vpop.trf.xlu0
        %v252 = vpop.trf.xlu0
        %s253 = scalar_lea.vmem %s129, 8 [#allocation3]
        %254 = vst.msk [vmem:[%s253] sm:$0xff] %vm214, %v237
        %255 = vst.msk [vmem:[%s253 + $0x20] sm:$0xff] %vm214, %v238
        %256 = vst.msk [vmem:[%s253 + $0x40] sm:$0xff] %vm214, %v239
        %257 = vst.msk [vmem:[%s253 + $0x60] sm:$0xff] %vm214, %v240
        %s258 = scalar_lea.vmem %s135, 1
        %v259 = vld [vmem:[%s258] ss:$2 sm:$0xff]
        %s260 = scalar_lea.vmem %s135, 17
        %v261 = vld [vmem:[%s260] ss:$2 sm:$0xff]
        %s262 = scalar_lea.vmem %s135, 33
        %v263 = vld [vmem:[%s262] ss:$2 sm:$0xff]
        %s264 = scalar_lea.vmem %s135, 49
        %v265 = vld [vmem:[%s264] ss:$2 sm:$0xff]
        %266 = vxpose.xlu0.b32.start [1/16] %v259, 128
        %267 = vxpose.xlu0.b32.cont [2/16] %v261, 128
        %268 = vxpose.xlu0.b32.cont [3/16] %v263, 128
        %269 = vxpose.xlu0.b32.cont [4/16] %v265, 128
        %270 = vxpose.xlu0.b32.cont [5/16] 0.0, 128
        %271 = vxpose.xlu0.b32.cont [6/16] 0.0, 128
        %272 = vxpose.xlu0.b32.cont [7/16] 0.0, 128
        %273 = vxpose.xlu0.b32.cont [8/16] 0.0, 128
        %274 = vxpose.xlu0.b32.cont [9/16] 0.0, 128
        %275 = vxpose.xlu0.b32.cont [10/16] 0.0, 128
        %276 = vxpose.xlu0.b32.cont [11/16] 0.0, 128
        %277 = vxpose.xlu0.b32.cont [12/16] 0.0, 128
        %278 = vxpose.xlu0.b32.cont [13/16] 0.0, 128
        %279 = vxpose.xlu0.b32.cont [14/16] 0.0, 128
        %280 = vxpose.xlu0.b32.cont [15/16] 0.0, 128
        %281 = vxpose.xlu0.b32.end [16/16] 0.0, 128
        %v282 = vpop.trf.xlu0
        %v283 = vpop.trf.xlu0
        %v284 = vpop.trf.xlu0
        %v285 = vpop.trf.xlu0
        %v286 = vpop.trf.xlu0
        %v287 = vpop.trf.xlu0
        %v288 = vpop.trf.xlu0
        %v289 = vpop.trf.xlu0
        %v290 = vpop.trf.xlu0
        %v291 = vpop.trf.xlu0
        %v292 = vpop.trf.xlu0
        %v293 = vpop.trf.xlu0
        %v294 = vpop.trf.xlu0
        %v295 = vpop.trf.xlu0
        %v296 = vpop.trf.xlu0
        %v297 = vpop.trf.xlu0
        %298 = vst.msk [vmem:[#allocation2] sm:$0xff] %vm178, %v282
        %299 = vst.msk [vmem:[#allocation2 + $0x8] sm:$0xff] %vm178, %v283
        %v300 = vld [vmem:[#allocation2] ss:$2 sm:$0xff]
        %301 = vxpose.xlu0.b32.start [1/16] %v300, 128
        %302 = vxpose.xlu0.b32.cont [2/16] 0.0, 128
        %303 = vxpose.xlu0.b32.cont [3/16] 0.0, 128
        %304 = vxpose.xlu0.b32.cont [4/16] 0.0, 128
        %305 = vxpose.xlu0.b32.cont [5/16] 0.0, 128
        %306 = vxpose.xlu0.b32.cont [6/16] 0.0, 128
        %307 = vxpose.xlu0.b32.cont [7/16] 0.0, 128
        %308 = vxpose.xlu0.b32.cont [8/16] 0.0, 128
        %309 = vxpose.xlu0.b32.cont [9/16] 0.0, 128
        %310 = vxpose.xlu0.b32.cont [10/16] 0.0, 128
        %311 = vxpose.xlu0.b32.cont [11/16] 0.0, 128
        %312 = vxpose.xlu0.b32.cont [12/16] 0.0, 128
        %313 = vxpose.xlu0.b32.cont [13/16] 0.0, 128
        %314 = vxpose.xlu0.b32.cont [14/16] 0.0, 128
        %315 = vxpose.xlu0.b32.cont [15/16] 0.0, 128
        %316 = vxpose.xlu0.b32.end [16/16] 0.0, 128
        %v317 = vpop.trf.xlu0
        %v318 = vpop.trf.xlu0
        %v319 = vpop.trf.xlu0
        %v320 = vpop.trf.xlu0
        %v321 = vpop.trf.xlu0
        %v322 = vpop.trf.xlu0
        %v323 = vpop.trf.xlu0
        %v324 = vpop.trf.xlu0
        %v325 = vpop.trf.xlu0
        %v326 = vpop.trf.xlu0
        %v327 = vpop.trf.xlu0
        %v328 = vpop.trf.xlu0
        %v329 = vpop.trf.xlu0
        %v330 = vpop.trf.xlu0
        %v331 = vpop.trf.xlu0
        %v332 = vpop.trf.xlu0
        %s333 = scalar_lea.vmem %s129, 16 [#allocation3]
        %334 = vst.msk [vmem:[%s333] sm:$0xff] %vm214, %v317
        %335 = vst.msk [vmem:[%s333 + $0x20] sm:$0xff] %vm214, %v318
        %336 = vst.msk [vmem:[%s333 + $0x40] sm:$0xff] %vm214, %v319
        %337 = vst.msk [vmem:[%s333 + $0x60] sm:$0xff] %vm214, %v320
        %v338 = vld [vmem:[%s219] ss:$2 sm:$0xff]
        %339 = vxpose.xlu0.b32.start [1/16] %v338, 128
        %340 = vxpose.xlu0.b32.cont [2/16] 0.0, 128
        %341 = vxpose.xlu0.b32.cont [3/16] 0.0, 128
        %342 = vxpose.xlu0.b32.cont [4/16] 0.0, 128
        %343 = vxpose.xlu0.b32.cont [5/16] 0.0, 128
        %344 = vxpose.xlu0.b32.cont [6/16] 0.0, 128
        %345 = vxpose.xlu0.b32.cont [7/16] 0.0, 128
        %346 = vxpose.xlu0.b32.cont [8/16] 0.0, 128
        %347 = vxpose.xlu0.b32.cont [9/16] 0.0, 128
        %348 = vxpose.xlu0.b32.cont [10/16] 0.0, 128
        %349 = vxpose.xlu0.b32.cont [11/16] 0.0, 128
        %350 = vxpose.xlu0.b32.cont [12/16] 0.0, 128
        %351 = vxpose.xlu0.b32.cont [13/16] 0.0, 128
        %352 = vxpose.xlu0.b32.cont [14/16] 0.0, 128
        %353 = vxpose.xlu0.b32.cont [15/16] 0.0, 128
        %354 = vxpose.xlu0.b32.end [16/16] 0.0, 128
        %v355 = vpop.trf.xlu0
        %v356 = vpop.trf.xlu0
        %v357 = vpop.trf.xlu0
        %v358 = vpop.trf.xlu0
        %v359 = vpop.trf.xlu0
        %v360 = vpop.trf.xlu0
        %v361 = vpop.trf.xlu0
        %v362 = vpop.trf.xlu0
        %v363 = vpop.trf.xlu0
        %v364 = vpop.trf.xlu0
        %v365 = vpop.trf.xlu0
        %v366 = vpop.trf.xlu0
        %v367 = vpop.trf.xlu0
        %v368 = vpop.trf.xlu0
        %v369 = vpop.trf.xlu0
        %v370 = vpop.trf.xlu0
        %s371 = scalar_lea.vmem %s129, 24 [#allocation3]
        %372 = vst.msk [vmem:[%s371] sm:$0xff] %vm214, %v355
        %373 = vst.msk [vmem:[%s371 + $0x20] sm:$0xff] %vm214, %v356
        %374 = vst.msk [vmem:[%s371 + $0x40] sm:$0xff] %vm214, %v357
        %375 = vst.msk [vmem:[%s371 + $0x60] sm:$0xff] %vm214, %v358
        %s376 = sand.u32 %s65, 1
        %s377 = scalar_lea.sflag [#allocation4], %s376
        %s378 = sand.u32 %s65, 1
        %s379 = smul.addr %s378, 128
        %s380 = scalar_lea.vmem [#allocation3], %s379
        // Predicated region
        $region25: #{tpu_custom_call.1} parent=23 // pred_check
          %p381 = pneg %p75
        $region26: #{tpu_custom_call.1} parent=23 // pred_check_branch
          %383 = sbr.rel (%p381) target = $region28
        $region27: #{tpu_custom_call.1} parent=23 // pred_region
          %s384 = smul.u32 4, %s19
          %s386 = ssub.s32 2048, 2048
          %387 = vsyncadd %s377, %s386
          %s388 = smul.addr %s384, 4
          %s389 = sadd.s32 %s20, %s388
          %s390 = smul.addr %s389, 128
          %s391 = scalar_lea.hbm %s1, %s390
          %s392 = sshll.u32 %s380, 4
          %s393 = int_to_ptr.vmem [resolvable:$true] %s392
          %398 = dma.vmem_to_hbm [thread:$0]  %s393, 2048, %s391, %s377, 128, 128, 8
        $region28: #{tpu_custom_call.1} parent=23 // pred_fallthru
          _
      $region24: #{tpu_custom_call.1} parent=5 // pred_fallthru
        _
      %p399 = scmp.le.s32.totalorder 2, %s10
      // Predicated region
      $region29: #{tpu_custom_call.1} parent=5 // pred_check
        %p400 = pneg %p399
      $region30: #{tpu_custom_call.1} parent=5 // pred_check_branch
        %402 = sbr.rel (%p400) target = $region32
      $region31: #{tpu_custom_call.1} parent=5 // pred_region
        %s403 = ssub.s32 %s10, 2
        // Predicated region
        $region33: #{tpu_custom_call.1} parent=31 // pred_check
          %p404 = pneg %p81
        $region34: #{tpu_custom_call.1} parent=31 // pred_check_branch
          %406 = sbr.rel (%p404) target = $region36
        $region35: #{tpu_custom_call.1} parent=31 // pred_region
          %s407 = sand.u32 %s66, 1
          %s408 = scalar_lea.sflag [#allocation4], %s407
          %s409 = sand.u32 %s66, 1
          %s410 = smul.addr %s409, 128
          %s411 = scalar_lea.vmem [#allocation3], %s410
          %412 = dma.done %s408, 2048
        $region36: #{tpu_custom_call.1} parent=31 // pred_fallthru
          _
      $region32: #{tpu_custom_call.1} parent=5 // pred_fallthru
        _
    $region6: #{tpu_custom_call.1} parent=1 // loop_footer
      %s14 = sadd.s32 1, %s10
    $region7: #{tpu_custom_call.1} parent=1 // loop_footer_branch
      %9 = sbr.rel target = $region3
    $region8: #{tpu_custom_call.1} parent=1 // loop_exit
      _
    %413 = vsyncpa [#allocation4], 1
    %s414 = scalar_lea.sflag [#allocation4], 1
    %415 = vsyncpa %s414, 1

</llo_original>
